<compile_context>
chip_gen: v7x
topology: tpu7x:2x2x1
jax: 0.10.0
libtpu: 0.0.40
codegen_flags: <defaults>
</compile_context>

<pallas_src>
import jax
import jax.numpy as jnp
from jax.experimental import pallas as pl
from jax.experimental.pallas import tpu as pltpu

LN_EPS = 1e-5  # PyTorch nn.LayerNorm default


def _round_up(x, m):
    return ((x + m - 1) // m) * m


def _layernorm(x, gamma, beta):
    # LayerNorm over the last dim, biased variance (matches torch), f32 math
    # (v5e has no bf16 VPU/EUP, so keep the elementwise epilogue in f32).
    mean = jnp.mean(x, axis=-1, keepdims=True)
    centered = x - mean
    var = jnp.mean(centered * centered, axis=-1, keepdims=True)
    inv = jax.lax.rsqrt(var + LN_EPS)
    return centered * inv * gamma + beta


def actor_fwd_kernel(x_ref, w1_ref, p1_ref, w2_ref, p2_ref, w3_ref, b3_ref, o_ref):
    x = x_ref[...]  # f32 [block_batch, input_dim]

    # Packed per-layer params: row 0 = linear bias, row 1 = LN gamma, row 2 = LN beta.
    p1 = p1_ref[...]
    p2 = p2_ref[...]

    # fc1 -> LayerNorm -> ReLU
    h = jnp.dot(x, w1_ref[...], preferred_element_type=jnp.float32) + p1[0:1, :]
    h = _layernorm(h, p1[1:2, :], p1[2:3, :])
    h = jnp.maximum(h, 0.0)

    # fc2 -> LayerNorm -> ReLU
    h = jnp.dot(h, w2_ref[...], preferred_element_type=jnp.float32) + p2[0:1, :]
    h = _layernorm(h, p2[1:2, :], p2[2:3, :])
    h = jnp.maximum(h, 0.0)

    # mu -> tanh, stored at the real (narrow) action width.
    out = jnp.dot(h, w3_ref[...], preferred_element_type=jnp.float32) + b3_ref[...]
    o_ref[...] = jnp.tanh(out).astype(o_ref.dtype)


def actor_forward(state, packed, *, block_batch=512, out_dtype=jnp.float32):
    """state: [B, input_dim] f32; packed: output of pack_params().

    Returns [B, n_actions] in out_dtype.
    """
    B, input_dim = state.shape
    w1, p1, w2, p2, w3, b3 = (packed[k] for k in ("w1", "p1", "w2", "p2", "w3", "b3"))
    n_actions = w3.shape[1]

    # Tile size: as large as requested, but capped so the grid has >= 2 steps
    # when the batch is big enough (keeps both v7x TensorCores busy), rounded
    # to the 8-row sublane granule.
    bb = min(_round_up(block_batch, 8), _round_up(pl.cdiv(B, 2), 8))
    bb = max(bb, 8)
    grid_n = pl.cdiv(B, bb)
    b_pad = grid_n * bb

    x = state
    if b_pad != B:
        # Zero-pad the (narrow) input; padded rows produce finite garbage that
        # is sliced off below.
        x = jnp.pad(state, ((0, b_pad - B), (0, 0)))

    def _full(arr):
        # Full-extent block with a constant index_map: Pallas fetches it once
        # and keeps it resident in VMEM across all grid steps.
        return pl.BlockSpec(arr.shape, lambda i: (0, 0))

    in_specs = [
        pl.BlockSpec((bb, input_dim), lambda i: (i, 0)),
        _full(w1), _full(p1), _full(w2), _full(p2), _full(w3), _full(b3),
    ]
    out_specs = pl.BlockSpec((bb, n_actions), lambda i: (i, 0))

    out = pl.pallas_call(
        actor_fwd_kernel,
        out_shape=jax.ShapeDtypeStruct((b_pad, n_actions), out_dtype),
        grid=(grid_n,),
        in_specs=in_specs,
        out_specs=out_specs,
        compiler_params=pltpu.CompilerParams(dimension_semantics=("parallel",)),
    )(x, w1, p1, w2, p2, w3, b3)

    return out if b_pad == B else out[:B]


def init_params(key, input_dim, fc1_dims, fc2_dims, n_actions):
    """Deterministic init mirroring the PyTorch module's __init__.

    PyTorch fc weight has shape (out, in); the module uses
    f = 1/sqrt(weight.size()[0]) = 1/sqrt(out_features) as the uniform bound.
    Weights are stored transposed as [in, out] for the kernel's x @ W.
    """
    k1, k2, k3, k4, k5, k6 = jax.random.split(key, 6)

    f1 = 1.0 / jnp.sqrt(jnp.float32(fc1_dims))
    f2 = 1.0 / jnp.sqrt(jnp.float32(fc2_dims))
    f4 = 0.003

    return {
        "w1": jax.random.uniform(k1, (input_dim, fc1_dims), jnp.float32, -f1, f1),
        "b1": jax.random.uniform(k2, (1, fc1_dims), jnp.float32, -f1, f1),
        "g1": jnp.ones((1, fc1_dims), jnp.float32),     # LayerNorm weight
        "be1": jnp.zeros((1, fc1_dims), jnp.float32),   # LayerNorm bias
        "w2": jax.random.uniform(k3, (fc1_dims, fc2_dims), jnp.float32, -f2, f2),
        "b2": jax.random.uniform(k4, (1, fc2_dims), jnp.float32, -f2, f2),
        "g2": jnp.ones((1, fc2_dims), jnp.float32),
        "be2": jnp.zeros((1, fc2_dims), jnp.float32),
        "w3": jax.random.uniform(k5, (fc2_dims, n_actions), jnp.float32, -f4, f4),
        "b3": jax.random.uniform(k6, (1, n_actions), jnp.float32, -f4, f4),
    }


def pack_params(raw):
    """Pack the small per-layer vectors into [3, N] slabs (fewer DMAs)."""
    return {
        "w1": raw["w1"],
        "p1": jnp.concatenate([raw["b1"], raw["g1"], raw["be1"]], axis=0),  # [3, fc1]
        "w2": raw["w2"],
        "p2": jnp.concatenate([raw["b2"], raw["g2"], raw["be2"]], axis=0),  # [3, fc2]
        "w3": raw["w3"],
        "b3": raw["b3"],
    }


def actor_forward_ref(state, raw):
    """Pure-JAX reference for correctness checking (uses unpacked params)."""
    x = state @ raw["w1"] + raw["b1"]
    x = _layernorm(x, raw["g1"], raw["be1"])
    x = jnp.maximum(x, 0.0)
    x = x @ raw["w2"] + raw["b2"]
    x = _layernorm(x, raw["g2"], raw["be2"])
    x = jnp.maximum(x, 0.0)
    return jnp.tanh(x @ raw["w3"] + raw["b3"])


if __name__ == "__main__":
    # Small shapes consistent with the module: state is [batch, input_dim].
    batch, input_dim, fc1_dims, fc2_dims, n_actions = 8, 16, 64, 32, 4

    key = jax.random.PRNGKey(0)
    k_state, k_params, k_big = jax.random.split(key, 3)
    state = jax.random.normal(k_state, (batch, input_dim), dtype=jnp.float32)
    raw = init_params(k_params, input_dim, fc1_dims, fc2_dims, n_actions)
    packed = pack_params(raw)

    # Small batch: single grid step.
    out = jax.block_until_ready(actor_forward(state, packed))
    ref = actor_forward_ref(state, raw)
    assert out.shape == (batch, n_actions)
    assert jnp.allclose(out, ref, atol=1e-5, rtol=1e-5), "small-batch mismatch vs reference"

    # Large non-multiple batch: exercises the cdiv grid, the zero-padded tail
    # tile, and the >=2-step v7x megacore split.
    big_b = 1000
    big_state = jax.random.normal(k_big, (big_b, input_dim), dtype=jnp.float32)
    out_big = jax.block_until_ready(actor_forward(big_state, packed))
    ref_big = actor_forward_ref(big_state, raw)
    assert out_big.shape == (big_b, n_actions)
    assert jnp.allclose(out_big, ref_big, atol=1e-5, rtol=1e-5), "big-batch mismatch vs reference"

    # bf16-output path (halves the output writeback stream); looser tolerance.
    out_bf16 = jax.block_until_ready(
        actor_forward(big_state, packed, out_dtype=jnp.bfloat16))
    assert out_bf16.dtype == jnp.bfloat16 and out_bf16.shape == (big_b, n_actions)
    assert jnp.allclose(out_bf16.astype(jnp.float32), ref_big, atol=1e-2, rtol=1e-2), \
        "bf16-output mismatch vs reference"

    print("KERNEL_OK")
</pallas_src>

<mosaic_0001>
module attributes {stable_mosaic.version = 11 : i64} {
  func.func @actor_fwd_kernel(%arg0: i32, %arg1: memref<8x16xf32, #tpu.memory_space<vmem>>, %arg2: memref<16x64xf32, #tpu.memory_space<vmem>>, %arg3: memref<3x64xf32, #tpu.memory_space<vmem>>, %arg4: memref<64x32xf32, #tpu.memory_space<vmem>>, %arg5: memref<3x32xf32, #tpu.memory_space<vmem>>, %arg6: memref<32x4xf32, #tpu.memory_space<vmem>>, %arg7: memref<1x4xf32, #tpu.memory_space<vmem>>, %arg8: memref<8x4xf32, #tpu.memory_space<vmem>>) attributes {dimension_semantics = [#tpu.dimension_semantics<parallel>], iteration_bounds = array<i64: 1>, scalar_prefetch = 0 : i64, scratch_operands = 0 : i64, tpu.core_type = #tpu.core_type<tc>, window_params = [{transform_indices = @transform_0, window_bounds = array<i64: 8, 16>}, {pipeline_mode = #tpu.pipeline_mode<synchronous>, transform_indices = @transform_1, window_bounds = array<i64: 16, 64>}, {pipeline_mode = #tpu.pipeline_mode<synchronous>, transform_indices = @transform_2, window_bounds = array<i64: 3, 64>}, {pipeline_mode = #tpu.pipeline_mode<synchronous>, transform_indices = @transform_3, window_bounds = array<i64: 64, 32>}, {pipeline_mode = #tpu.pipeline_mode<synchronous>, transform_indices = @transform_4, window_bounds = array<i64: 3, 32>}, {pipeline_mode = #tpu.pipeline_mode<synchronous>, transform_indices = @transform_5, window_bounds = array<i64: 32, 4>}, {pipeline_mode = #tpu.pipeline_mode<synchronous>, transform_indices = @transform_6, window_bounds = array<i64: 1, 4>}, {transform_indices = @transform_7, window_bounds = array<i64: 8, 4>}]} {
    %c0 = arith.constant 0 : index
    %c0_0 = arith.constant 0 : index
    %0 = vector.load %arg1[%c0, %c0_0] : memref<8x16xf32, #tpu.memory_space<vmem>>, vector<8x16xf32>
    %c0_1 = arith.constant 0 : index
    %c0_2 = arith.constant 0 : index
    %1 = vector.load %arg3[%c0_1, %c0_2] : memref<3x64xf32, #tpu.memory_space<vmem>>, vector<3x64xf32>
    %c0_3 = arith.constant 0 : index
    %c0_4 = arith.constant 0 : index
    %2 = vector.load %arg5[%c0_3, %c0_4] : memref<3x32xf32, #tpu.memory_space<vmem>>, vector<3x32xf32>
    %c0_5 = arith.constant 0 : index
    %c0_6 = arith.constant 0 : index
    %3 = vector.load %arg2[%c0_5, %c0_6] : memref<16x64xf32, #tpu.memory_space<vmem>>, vector<16x64xf32>
    %cst = arith.constant dense<0.000000e+00> : vector<8x64xf32>
    %4 = tpu.matmul %0, %3, %cst {dimension_numbers = #tpu.dot_dimension_numbers<[1], [0], [0], [1], [0, 0, 1, 1], [], []>} : vector<8x16xf32>, vector<16x64xf32>, vector<8x64xf32> -> vector<8x64xf32>
    %5 = vector.extract_strided_slice %1 {offsets = [0, 0], sizes = [1, 64], strides = [1, 1]} : vector<3x64xf32> to vector<1x64xf32>
    %6 = vector.broadcast %5 : vector<1x64xf32> to vector<8x64xf32>
    %7 = arith.addf %4, %6 : vector<8x64xf32>
    %8 = vector.extract_strided_slice %1 {offsets = [1, 0], sizes = [1, 64], strides = [1, 1]} : vector<3x64xf32> to vector<1x64xf32>
    %9 = vector.extract_strided_slice %1 {offsets = [2, 0], sizes = [1, 64], strides = [1, 1]} : vector<3x64xf32> to vector<1x64xf32>
    %cst_7 = arith.constant dense<0.000000e+00> : vector<8xf32>
    %10 = vector.multi_reduction <add>, %7, %cst_7 [1] : vector<8x64xf32> to vector<8xf32>
    %11 = vector.shape_cast %10 : vector<8xf32> to vector<8x1xf32>
    %cst_8 = arith.constant 6.400000e+01 : f32
    %12 = vector.broadcast %cst_8 : f32 to vector<8x1xf32>
    %13 = arith.divf %11, %12 : vector<8x1xf32>
    %14 = vector.broadcast %13 : vector<8x1xf32> to vector<8x64xf32>
    %15 = arith.subf %7, %14 : vector<8x64xf32>
    %16 = arith.mulf %15, %15 : vector<8x64xf32>
    %cst_9 = arith.constant dense<0.000000e+00> : vector<8xf32>
    %17 = vector.multi_reduction <add>, %16, %cst_9 [1] : vector<8x64xf32> to vector<8xf32>
    %18 = vector.shape_cast %17 : vector<8xf32> to vector<8x1xf32>
    %cst_10 = arith.constant 6.400000e+01 : f32
    %19 = vector.broadcast %cst_10 : f32 to vector<8x1xf32>
    %20 = arith.divf %18, %19 : vector<8x1xf32>
    %cst_11 = arith.constant 9.99999974E-6 : f32
    %21 = vector.broadcast %cst_11 : f32 to vector<8x1xf32>
    %22 = arith.addf %20, %21 : vector<8x1xf32>
    %23 = math.rsqrt %22 : vector<8x1xf32>
    %24 = vector.broadcast %23 : vector<8x1xf32> to vector<8x64xf32>
    %25 = arith.mulf %15, %24 : vector<8x64xf32>
    %26 = vector.broadcast %8 : vector<1x64xf32> to vector<8x64xf32>
    %27 = arith.mulf %25, %26 : vector<8x64xf32>
    %28 = vector.broadcast %9 : vector<1x64xf32> to vector<8x64xf32>
    %29 = arith.addf %27, %28 : vector<8x64xf32>
    %cst_12 = arith.constant 0.000000e+00 : f32
    %30 = vector.broadcast %cst_12 : f32 to vector<8x64xf32>
    %31 = arith.maximumf %29, %30 : vector<8x64xf32>
    %c0_13 = arith.constant 0 : index
    %c0_14 = arith.constant 0 : index
    %32 = vector.load %arg4[%c0_13, %c0_14] : memref<64x32xf32, #tpu.memory_space<vmem>>, vector<64x32xf32>
    %cst_15 = arith.constant dense<0.000000e+00> : vector<8x32xf32>
    %33 = tpu.matmul %31, %32, %cst_15 {dimension_numbers = #tpu.dot_dimension_numbers<[1], [0], [0], [1], [0, 0, 1, 1], [], []>} : vector<8x64xf32>, vector<64x32xf32>, vector<8x32xf32> -> vector<8x32xf32>
    %34 = vector.extract_strided_slice %2 {offsets = [0, 0], sizes = [1, 32], strides = [1, 1]} : vector<3x32xf32> to vector<1x32xf32>
    %35 = vector.broadcast %34 : vector<1x32xf32> to vector<8x32xf32>
    %36 = arith.addf %33, %35 : vector<8x32xf32>
    %37 = vector.extract_strided_slice %2 {offsets = [1, 0], sizes = [1, 32], strides = [1, 1]} : vector<3x32xf32> to vector<1x32xf32>
    %38 = vector.extract_strided_slice %2 {offsets = [2, 0], sizes = [1, 32], strides = [1, 1]} : vector<3x32xf32> to vector<1x32xf32>
    %cst_16 = arith.constant dense<0.000000e+00> : vector<8xf32>
    %39 = vector.multi_reduction <add>, %36, %cst_16 [1] : vector<8x32xf32> to vector<8xf32>
    %40 = vector.shape_cast %39 : vector<8xf32> to vector<8x1xf32>
    %cst_17 = arith.constant 3.200000e+01 : f32
    %41 = vector.broadcast %cst_17 : f32 to vector<8x1xf32>
    %42 = arith.divf %40, %41 : vector<8x1xf32>
    %43 = vector.broadcast %42 : vector<8x1xf32> to vector<8x32xf32>
    %44 = arith.subf %36, %43 : vector<8x32xf32>
    %45 = arith.mulf %44, %44 : vector<8x32xf32>
    %cst_18 = arith.constant dense<0.000000e+00> : vector<8xf32>
    %46 = vector.multi_reduction <add>, %45, %cst_18 [1] : vector<8x32xf32> to vector<8xf32>
    %47 = vector.shape_cast %46 : vector<8xf32> to vector<8x1xf32>
    %cst_19 = arith.constant 3.200000e+01 : f32
    %48 = vector.broadcast %cst_19 : f32 to vector<8x1xf32>
    %49 = arith.divf %47, %48 : vector<8x1xf32>
    %cst_20 = arith.constant 9.99999974E-6 : f32
    %50 = vector.broadcast %cst_20 : f32 to vector<8x1xf32>
    %51 = arith.addf %49, %50 : vector<8x1xf32>
    %52 = math.rsqrt %51 : vector<8x1xf32>
    %53 = vector.broadcast %52 : vector<8x1xf32> to vector<8x32xf32>
    %54 = arith.mulf %44, %53 : vector<8x32xf32>
    %55 = vector.broadcast %37 : vector<1x32xf32> to vector<8x32xf32>
    %56 = arith.mulf %54, %55 : vector<8x32xf32>
    %57 = vector.broadcast %38 : vector<1x32xf32> to vector<8x32xf32>
    %58 = arith.addf %56, %57 : vector<8x32xf32>
    %cst_21 = arith.constant 0.000000e+00 : f32
    %59 = vector.broadcast %cst_21 : f32 to vector<8x32xf32>
    %60 = arith.maximumf %58, %59 : vector<8x32xf32>
    %c0_22 = arith.constant 0 : index
    %c0_23 = arith.constant 0 : index
    %61 = vector.load %arg6[%c0_22, %c0_23] : memref<32x4xf32, #tpu.memory_space<vmem>>, vector<32x4xf32>
    %cst_24 = arith.constant dense<0.000000e+00> : vector<8x4xf32>
    %62 = tpu.matmul %60, %61, %cst_24 {dimension_numbers = #tpu.dot_dimension_numbers<[1], [0], [0], [1], [0, 0, 1, 1], [], []>} : vector<8x32xf32>, vector<32x4xf32>, vector<8x4xf32> -> vector<8x4xf32>
    %c0_25 = arith.constant 0 : index
    %c0_26 = arith.constant 0 : index
    %63 = vector.load %arg7[%c0_25, %c0_26] : memref<1x4xf32, #tpu.memory_space<vmem>>, vector<1x4xf32>
    %64 = vector.broadcast %63 : vector<1x4xf32> to vector<8x4xf32>
    %65 = arith.addf %62, %64 : vector<8x4xf32>
    %66 = math.tanh %65 : vector<8x4xf32>
    %c0_27 = arith.constant 0 : index
    %c0_28 = arith.constant 0 : index
    %67 = vector.load %arg8[%c0_27, %c0_28] : memref<8x4xf32, #tpu.memory_space<vmem>>, vector<8x4xf32>
    tpu.vector_store %arg8[%c0_27, %c0_28], %66 {strides = array<i32>} : memref<8x4xf32, #tpu.memory_space<vmem>>, vector<8x4xf32>,
    return
  }
  func.func @transform_0(%arg0: i32) -> (i32, i32) {
    %c0_i32 = arith.constant 0 : i32
    %c0_i32_0 = arith.constant 0 : i32
    return %arg0, %c0_i32 : i32, i32
  }
  func.func @transform_1(%arg0: i32) -> (i32, i32) {
    %c0_i32 = arith.constant 0 : i32
    %c0_i32_0 = arith.constant 0 : i32
    %c0_i32_1 = arith.constant 0 : i32
    return %c0_i32, %c0_i32_0 : i32, i32
  }
  func.func @transform_2(%arg0: i32) -> (i32, i32) {
    %c0_i32 = arith.constant 0 : i32
    %c0_i32_0 = arith.constant 0 : i32
    %c0_i32_1 = arith.constant 0 : i32
    return %c0_i32, %c0_i32_0 : i32, i32
  }
  func.func @transform_3(%arg0: i32) -> (i32, i32) {
    %c0_i32 = arith.constant 0 : i32
    %c0_i32_0 = arith.constant 0 : i32
    %c0_i32_1 = arith.constant 0 : i32
    return %c0_i32, %c0_i32_0 : i32, i32
  }
  func.func @transform_4(%arg0: i32) -> (i32, i32) {
    %c0_i32 = arith.constant 0 : i32
    %c0_i32_0 = arith.constant 0 : i32
    %c0_i32_1 = arith.constant 0 : i32
    return %c0_i32, %c0_i32_0 : i32, i32
  }
  func.func @transform_5(%arg0: i32) -> (i32, i32) {
    %c0_i32 = arith.constant 0 : i32
    %c0_i32_0 = arith.constant 0 : i32
    %c0_i32_1 = arith.constant 0 : i32
    return %c0_i32, %c0_i32_0 : i32, i32
  }
  func.func @transform_6(%arg0: i32) -> (i32, i32) {
    %c0_i32 = arith.constant 0 : i32
    %c0_i32_0 = arith.constant 0 : i32
    %c0_i32_1 = arith.constant 0 : i32
    return %c0_i32, %c0_i32_0 : i32, i32
  }
  func.func @transform_7(%arg0: i32) -> (i32, i32) {
    %c0_i32 = arith.constant 0 : i32
    %c0_i32_0 = arith.constant 0 : i32
    return %arg0, %c0_i32 : i32, i32
  }
}

</mosaic_0001>

<llo_original>
// kernel: tpu_custom_call.1
$region0: #{tpu_custom_call.1}
  #allocation0 [shape = 'u32[]', space=smem, size = 0x4, offset = 0x4, fixed_abs, tag = 'smem constant byte address 0x4 - core index']
  #allocation1 [shape = 'u32[144,128]{1,0:T(1,128)}', space=vmem, size = 0x12000, scoped, tag = 'internal scratch']
  %s0 = inlined_call_operand.vmem [shape: f32[8,16], index: 0, kind: input, shape index: {}]
  %s1 = inlined_call_operand.vmem [shape: f32[16,64], index: 1, kind: input, shape index: {}]
  %s2 = inlined_call_operand.vmem [shape: f32[3,64], index: 2, kind: input, shape index: {}]
  %s3 = inlined_call_operand.vmem [shape: f32[64,32], index: 3, kind: input, shape index: {}]
  %s4 = inlined_call_operand.vmem [shape: f32[3,32], index: 4, kind: input, shape index: {}]
  %s5 = inlined_call_operand.vmem [shape: f32[32,4], index: 5, kind: input, shape index: {}]
  %s6 = inlined_call_operand.vmem [shape: f32[1,4], index: 6, kind: input, shape index: {}]
  %s7 = inlined_call_operand.vmem [shape: f32[8,4], index: 7, kind: output, shape index: {}]
  %s8 = sld [smem:[#allocation0]]
  $region38: #{tpu_custom_call.1} parent=0
    _
  %s10 = ssub.s32 1, %s8
  %s11 = scalar_select 0, %s10, %s8
  // Predicated region
  $region2: #{tpu_custom_call.1} parent=0 // pred_check
    _
  $region3: #{tpu_custom_call.1} parent=0 // pred_check_branch
    %13 = sbr.rel (0) target = $region5
  $region4: #{tpu_custom_call.1} parent=0 // pred_region
    _
  $region5: #{tpu_custom_call.1} parent=0 // pred_fallthru
    _
  // Predicated region
  $region6: #{tpu_custom_call.1} parent=0 // pred_check
    _
  $region7: #{tpu_custom_call.1} parent=0 // pred_check_branch
    %15 = sbr.rel (0) target = $region9
  $region8: #{tpu_custom_call.1} parent=0 // pred_region
    _
  $region9: #{tpu_custom_call.1} parent=0 // pred_fallthru
    _
  // Predicated region
  $region10: #{tpu_custom_call.1} parent=0 // pred_check
    _
  $region11: #{tpu_custom_call.1} parent=0 // pred_check_branch
    %17 = sbr.rel (0) target = $region13
  $region12: #{tpu_custom_call.1} parent=0 // pred_region
    _
  $region13: #{tpu_custom_call.1} parent=0 // pred_fallthru
    _
  // Predicated region
  $region14: #{tpu_custom_call.1} parent=0 // pred_check
    _
  $region15: #{tpu_custom_call.1} parent=0 // pred_check_branch
    %19 = sbr.rel (0) target = $region17
  $region16: #{tpu_custom_call.1} parent=0 // pred_region
    _
  $region17: #{tpu_custom_call.1} parent=0 // pred_fallthru
    _
  // Predicated region
  $region18: #{tpu_custom_call.1} parent=0 // pred_check
    _
  $region19: #{tpu_custom_call.1} parent=0 // pred_check_branch
    %21 = sbr.rel (0) target = $region21
  $region20: #{tpu_custom_call.1} parent=0 // pred_region
    _
  $region21: #{tpu_custom_call.1} parent=0 // pred_fallthru
    _
  // Predicated region
  $region22: #{tpu_custom_call.1} parent=0 // pred_check
    _
  $region23: #{tpu_custom_call.1} parent=0 // pred_check_branch
    %23 = sbr.rel (0) target = $region25
  $region24: #{tpu_custom_call.1} parent=0 // pred_region
    _
  $region25: #{tpu_custom_call.1} parent=0 // pred_fallthru
    _
  // Predicated region
  $region26: #{tpu_custom_call.1} parent=0 // pred_check
    _
  $region27: #{tpu_custom_call.1} parent=0 // pred_check_branch
    %25 = sbr.rel (0) target = $region29
  $region28: #{tpu_custom_call.1} parent=0 // pred_region
    _
  $region29: #{tpu_custom_call.1} parent=0 // pred_fallthru
    _
  %v26 = vld [vmem:[%s0] sm:$0xff]
  %v27 = vld [vmem:[%s2] sm:$0x7]
  %v28 = vld [vmem:[%s4] sm:$0x7]
  %v29 = vld [vmem:[%s1] sm:$0xff]
  %v30 = vld [vmem:[%s1 + $0x8] sm:$0xff]
  %v31 = vlaneseq
  %v32 = vshrl.u32 %v31, 7
  %v33 = vsub.s32 0, %v32
  %v34 = vrot.slane %v27, %v33
  %vm35 = vcmask 130048
  %v37 = vsel %vm35, %v26, 0
  %39 = vmatprep.subr.mxu0 0.0
  %40 = vmatpush1.msra.mxu0 %v29
  %41 = vmatprep.subr.mxu0 0.0
  %42 = vmatpush1.msra.mxu0 %v30
  %43 = vmatprep.subr.mxu0 0.0
  %44 = vmatpush1.msra.mxu0 0.0
  %45 = vmatprep.subr.mxu0 0.0
  %46 = vmatpush1.msra.mxu0 0.0
  %47 = vmatprep.subr.mxu0 0.0
  %48 = vmatpush1.msra.mxu0 0.0
  %49 = vmatprep.subr.mxu0 0.0
  %50 = vmatpush1.msra.mxu0 0.0
  %51 = vmatprep.subr.mxu0 0.0
  %52 = vmatpush1.msra.mxu0 0.0
  %53 = vmatprep.subr.mxu0 0.0
  %54 = vmatpush1.msra.mxu0 0.0
  %55 = vmatprep.subr.mxu0 0.0
  %56 = vmatpush1.msra.mxu0 0.0
  %57 = vmatprep.subr.mxu0 0.0
  %58 = vmatpush1.msra.mxu0 0.0
  %59 = vmatprep.subr.mxu0 0.0
  %60 = vmatpush1.msra.mxu0 0.0
  %61 = vmatprep.subr.mxu0 0.0
  %62 = vmatpush1.msra.mxu0 0.0
  %63 = vmatprep.subr.mxu0 0.0
  %64 = vmatpush1.msra.mxu0 0.0
  %65 = vmatprep.subr.mxu0 0.0
  %66 = vmatpush1.msra.mxu0 0.0
  %67 = vmatprep.subr.mxu0 0.0
  %68 = vmatpush1.msra.mxu0 0.0
  %69 = vmatprep.subr.mxu0 0.0
  %70 = vmatpush1.msra.mxu0 0.0
  %71 = vmatprep.subr.mxu0 0.0
  %72 = vmatpush1.msra.mxu0 0.0
  %73 = vmatprep.subr.mxu0 0.0
  %74 = vmatpush1.msra.mxu0 0.0
  %75 = vmatprep.subr.mxu0 0.0
  %76 = vmatpush1.msra.mxu0 0.0
  %77 = vmatprep.subr.mxu0 0.0
  %78 = vmatpush1.msra.mxu0 0.0
  %79 = vmatprep.subr.mxu0 0.0
  %80 = vmatpush1.msra.mxu0 0.0
  %81 = vmatprep.subr.mxu0 0.0
  %82 = vmatpush1.msra.mxu0 0.0
  %83 = vmatprep.subr.mxu0 0.0
  %84 = vmatpush1.msra.mxu0 0.0
  %85 = vmatprep.subr.mxu0 0.0
  %86 = vmatpush1.msra.mxu0 0.0
  %87 = vmatprep.subr.mxu0 0.0
  %88 = vmatpush1.msra.mxu0 0.0
  %89 = vmatprep.subr.mxu0 0.0
  %90 = vmatpush1.msra.mxu0 0.0
  %91 = vmatprep.subr.mxu0 0.0
  %92 = vmatpush1.msra.mxu0 0.0
  %93 = vmatprep.subr.mxu0 0.0
  %94 = vmatpush1.msra.mxu0 0.0
  %95 = vmatprep.subr.mxu0 0.0
  %96 = vmatpush1.msra.mxu0 0.0
  %97 = vmatprep.subr.mxu0 0.0
  %98 = vmatpush1.msra.mxu0 0.0
  %99 = vmatprep.subr.mxu0 0.0
  %100 = vmatpush1.msra.mxu0 0.0
  %101 = vmatprep.subr.mxu0 0.0
  %102 = vmatpush1.msra.mxu0 0.0
  %103 = vmatprep.mubr.f32.mxu0 0.0
  %104 = vmatmul.mubr.f32.gmra.mrb[0].mxu0 %v37
  %v105 = vpop.f32.mrb[0].mxu0
  %v106 = vadd.f32 %v34, %v105
  %v107 = vpop.f32.mrb[0].mxu0
  %108 = vdwg.mxu0
  %vm109 = vcmask 523264
  %v110 = vsel %vm109, %v106, 0.0
  %111 = vadd.xlane.f32.xlu0 %v110
  %v112 = vpop.xlane.xlu0 %111
  %v113 = vrcp.pop 64.0
  %v114 = vmul.f32 %v112, %v113
  %v115 = vsub.f32 %v106, %v114
  %v116 = vmul.f32 %v115, %v115
  %v117 = vsel %vm109, %v116, 0.0
  %118 = vadd.xlane.f32.xlu0 %v117
  %v119 = vpop.xlane.xlu0 %118
  %v120 = vmul.f32 %v119, %v113
  %v121 = vadd.f32 %v120, 1e-05
  %v122 = vrsqrt.pop %v121
  %v123 = vmul.f32 %v115, %v122
  %v124 = vlaneseq
  %v125 = vshrl.u32 %v124, 7
  %v126 = vsub.s32 1, %v125
  %v127 = vrot.slane %v27, %v126
  %v128 = vmul.f32 %v123, %v127
  %v129 = vlaneseq
  %v130 = vshrl.u32 %v129, 7
  %v131 = vsub.s32 2, %v130
  %v132 = vrot.slane %v27, %v131
  %v133 = vadd.f32 %v128, %v132
  %v134 = vmax.f32 %v133, 0.0
  %v135 = vld [vmem:[%s3] sm:$0xff]
  %v136 = vld [vmem:[%s3 + $0x8] sm:$0xff]
  %v137 = vld [vmem:[%s3 + $0x10] sm:$0xff]
  %v138 = vld [vmem:[%s3 + $0x18] sm:$0xff]
  %v139 = vld [vmem:[%s3 + $0x20] sm:$0xff]
  %v140 = vld [vmem:[%s3 + $0x28] sm:$0xff]
  %v141 = vld [vmem:[%s3 + $0x30] sm:$0xff]
  %v142 = vld [vmem:[%s3 + $0x38] sm:$0xff]
  %v143 = vlaneseq
  %v144 = vshrl.u32 %v143, 7
  %v145 = vsub.s32 0, %v144
  %v146 = vrot.slane %v28, %v145
  %v148 = vsel %vm109, %v134, 0
  %150 = vmatprep.subr.mxu0 0.0
  %151 = vmatpush1.msra.mxu0 %v135
  %152 = vmatprep.subr.mxu0 0.0
  %153 = vmatpush1.msra.mxu0 %v136
  %154 = vmatprep.subr.mxu0 0.0
  %155 = vmatpush1.msra.mxu0 %v137
  %156 = vmatprep.subr.mxu0 0.0
  %157 = vmatpush1.msra.mxu0 %v138
  %158 = vmatprep.subr.mxu0 0.0
  %159 = vmatpush1.msra.mxu0 %v139
  %160 = vmatprep.subr.mxu0 0.0
  %161 = vmatpush1.msra.mxu0 %v140
  %162 = vmatprep.subr.mxu0 0.0
  %163 = vmatpush1.msra.mxu0 %v141
  %164 = vmatprep.subr.mxu0 0.0
  %165 = vmatpush1.msra.mxu0 %v142
  %166 = vmatprep.subr.mxu0 0.0
  %167 = vmatpush1.msra.mxu0 0.0
  %168 = vmatprep.subr.mxu0 0.0
  %169 = vmatpush1.msra.mxu0 0.0
  %170 = vmatprep.subr.mxu0 0.0
  %171 = vmatpush1.msra.mxu0 0.0
  %172 = vmatprep.subr.mxu0 0.0
  %173 = vmatpush1.msra.mxu0 0.0
  %174 = vmatprep.subr.mxu0 0.0
  %175 = vmatpush1.msra.mxu0 0.0
  %176 = vmatprep.subr.mxu0 0.0
  %177 = vmatpush1.msra.mxu0 0.0
  %178 = vmatprep.subr.mxu0 0.0
  %179 = vmatpush1.msra.mxu0 0.0
  %180 = vmatprep.subr.mxu0 0.0
  %181 = vmatpush1.msra.mxu0 0.0
  %182 = vmatprep.subr.mxu0 0.0
  %183 = vmatpush1.msra.mxu0 0.0
  %184 = vmatprep.subr.mxu0 0.0
  %185 = vmatpush1.msra.mxu0 0.0
  %186 = vmatprep.subr.mxu0 0.0
  %187 = vmatpush1.msra.mxu0 0.0
  %188 = vmatprep.subr.mxu0 0.0
  %189 = vmatpush1.msra.mxu0 0.0
  %190 = vmatprep.subr.mxu0 0.0
  %191 = vmatpush1.msra.mxu0 0.0
  %192 = vmatprep.subr.mxu0 0.0
  %193 = vmatpush1.msra.mxu0 0.0
  %194 = vmatprep.subr.mxu0 0.0
  %195 = vmatpush1.msra.mxu0 0.0
  %196 = vmatprep.subr.mxu0 0.0
  %197 = vmatpush1.msra.mxu0 0.0
  %198 = vmatprep.subr.mxu0 0.0
  %199 = vmatpush1.msra.mxu0 0.0
  %200 = vmatprep.subr.mxu0 0.0
  %201 = vmatpush1.msra.mxu0 0.0
  %202 = vmatprep.subr.mxu0 0.0
  %203 = vmatpush1.msra.mxu0 0.0
  %204 = vmatprep.subr.mxu0 0.0
  %205 = vmatpush1.msra.mxu0 0.0
  %206 = vmatprep.subr.mxu0 0.0
  %207 = vmatpush1.msra.mxu0 0.0
  %208 = vmatprep.subr.mxu0 0.0
  %209 = vmatpush1.msra.mxu0 0.0
  %210 = vmatprep.subr.mxu0 0.0
  %211 = vmatpush1.msra.mxu0 0.0
  %212 = vmatprep.subr.mxu0 0.0
  %213 = vmatpush1.msra.mxu0 0.0
  %214 = vmatprep.mubr.f32.mxu0 0.0
  %215 = vmatmul.mubr.f32.gmra.mrb[0].mxu0 %v148
  %v216 = vpop.f32.mrb[0].mxu0
  %v217 = vadd.f32 %v146, %v216
  %v218 = vpop.f32.mrb[0].mxu0
  %219 = vdwg.mxu0
  %vm220 = vcmask 261120
  %v221 = vsel %vm220, %v217, 0.0
  %222 = vadd.xlane.f32.xlu0 %v221
  %v223 = vpop.xlane.xlu0 %222
  %v224 = vrcp.pop 32.0
  %v225 = vmul.f32 %v223, %v224
  %v226 = vsub.f32 %v217, %v225
  %v227 = vmul.f32 %v226, %v226
  %v228 = vsel %vm220, %v227, 0.0
  %229 = vadd.xlane.f32.xlu0 %v228
  %v230 = vpop.xlane.xlu0 %229
  %v231 = vmul.f32 %v230, %v224
  %v232 = vadd.f32 %v231, 1e-05
  %v233 = vrsqrt.pop %v232
  %v234 = vmul.f32 %v226, %v233
  %v235 = vlaneseq
  %v236 = vshrl.u32 %v235, 7
  %v237 = vsub.s32 1, %v236
  %v238 = vrot.slane %v28, %v237
  %v239 = vmul.f32 %v234, %v238
  %v240 = vlaneseq
  %v241 = vshrl.u32 %v240, 7
  %v242 = vsub.s32 2, %v241
  %v243 = vrot.slane %v28, %v242
  %v244 = vadd.f32 %v239, %v243
  %v245 = vmax.f32 %v244, 0.0
  %v246 = vld [vmem:[%s5] sm:$0xff]
  %v247 = vld [vmem:[%s5 + $0x8] sm:$0xff]
  %v248 = vld [vmem:[%s5 + $0x10] sm:$0xff]
  %v249 = vld [vmem:[%s5 + $0x18] sm:$0xff]
  %v250 = vld [vmem:[%s6] sm:$0x1]
  %v252 = vlaneseq
  %v253 = vshrl.u32 %v252, 7
  %v254 = vsub.s32 0, %v253
  %v255 = vrot.slane %v250, %v254
  %v258 = vsel %vm220, %v245, 0
  %260 = vmatprep.subr.mxu0 0.0
  %261 = vmatpush1.msra.mxu0 %v246
  %262 = vmatprep.subr.mxu0 0.0
  %263 = vmatpush1.msra.mxu0 %v247
  %264 = vmatprep.subr.mxu0 0.0
  %265 = vmatpush1.msra.mxu0 %v248
  %266 = vmatprep.subr.mxu0 0.0
  %267 = vmatpush1.msra.mxu0 %v249
  %268 = vmatprep.subr.mxu0 0.0
  %269 = vmatpush1.msra.mxu0 0.0
  %270 = vmatprep.subr.mxu0 0.0
  %271 = vmatpush1.msra.mxu0 0.0
  %272 = vmatprep.subr.mxu0 0.0
  %273 = vmatpush1.msra.mxu0 0.0
  %274 = vmatprep.subr.mxu0 0.0
  %275 = vmatpush1.msra.mxu0 0.0
  %276 = vmatprep.subr.mxu0 0.0
  %277 = vmatpush1.msra.mxu0 0.0
  %278 = vmatprep.subr.mxu0 0.0
  %279 = vmatpush1.msra.mxu0 0.0
  %280 = vmatprep.subr.mxu0 0.0
  %281 = vmatpush1.msra.mxu0 0.0
  %282 = vmatprep.subr.mxu0 0.0
  %283 = vmatpush1.msra.mxu0 0.0
  %284 = vmatprep.subr.mxu0 0.0
  %285 = vmatpush1.msra.mxu0 0.0
  %286 = vmatprep.subr.mxu0 0.0
  %287 = vmatpush1.msra.mxu0 0.0
  %288 = vmatprep.subr.mxu0 0.0
  %289 = vmatpush1.msra.mxu0 0.0
  %290 = vmatprep.subr.mxu0 0.0
  %291 = vmatpush1.msra.mxu0 0.0
  %292 = vmatprep.subr.mxu0 0.0
  %293 = vmatpush1.msra.mxu0 0.0
  %294 = vmatprep.subr.mxu0 0.0
  %295 = vmatpush1.msra.mxu0 0.0
  %296 = vmatprep.subr.mxu0 0.0
  %297 = vmatpush1.msra.mxu0 0.0
  %298 = vmatprep.subr.mxu0 0.0
  %299 = vmatpush1.msra.mxu0 0.0
  %300 = vmatprep.subr.mxu0 0.0
  %301 = vmatpush1.msra.mxu0 0.0
  %302 = vmatprep.subr.mxu0 0.0
  %303 = vmatpush1.msra.mxu0 0.0
  %304 = vmatprep.subr.mxu0 0.0
  %305 = vmatpush1.msra.mxu0 0.0
  %306 = vmatprep.subr.mxu0 0.0
  %307 = vmatpush1.msra.mxu0 0.0
  %308 = vmatprep.subr.mxu0 0.0
  %309 = vmatpush1.msra.mxu0 0.0
  %310 = vmatprep.subr.mxu0 0.0
  %311 = vmatpush1.msra.mxu0 0.0
  %312 = vmatprep.subr.mxu0 0.0
  %313 = vmatpush1.msra.mxu0 0.0
  %314 = vmatprep.subr.mxu0 0.0
  %315 = vmatpush1.msra.mxu0 0.0
  %316 = vmatprep.subr.mxu0 0.0
  %317 = vmatpush1.msra.mxu0 0.0
  %318 = vmatprep.subr.mxu0 0.0
  %319 = vmatpush1.msra.mxu0 0.0
  %320 = vmatprep.subr.mxu0 0.0
  %321 = vmatpush1.msra.mxu0 0.0
  %322 = vmatprep.subr.mxu0 0.0
  %323 = vmatpush1.msra.mxu0 0.0
  %324 = vmatprep.mubr.f32.mxu0 0.0
  %325 = vmatmul.mubr.f32.gmra.mrb[0].mxu0 %v258
  %v326 = vpop.f32.mrb[0].mxu0
  %v327 = vadd.f32 %v255, %v326
  %v328 = vpop.f32.mrb[0].mxu0
  %329 = vdwg.mxu0
  %v330 = vtanh.pop %v327
  %vm331 = vcmask 31744
  %332 = vst.msk [vmem:[%s7] sm:$0xff] %vm331, %v330
  // Predicated region
  $region30: #{tpu_custom_call.1} parent=0 // pred_check
    _
  $region31: #{tpu_custom_call.1} parent=0 // pred_check_branch
    %334 = sbr.rel (0) target = $region33
  $region32: #{tpu_custom_call.1} parent=0 // pred_region
    _
  $region33: #{tpu_custom_call.1} parent=0 // pred_fallthru
    _
  // Predicated region
  $region34: #{tpu_custom_call.1} parent=0 // pred_check
    _
  $region35: #{tpu_custom_call.1} parent=0 // pred_check_branch
    %336 = sbr.rel (0) target = $region37
  $region36: #{tpu_custom_call.1} parent=0 // pred_region
    _
  $region37: #{tpu_custom_call.1} parent=0 // pred_fallthru
    _

</llo_original>
